<compile_context>
chip_gen: v7x
topology: tpu7x:2x2x1
jax: 0.10.0
libtpu: 0.0.40
codegen_flags: <defaults>
</compile_context>

<pallas_src>
import math

import numpy as np
import jax
import jax.numpy as jnp
from jax.experimental import pallas as pl
from jax.experimental.pallas import tpu as pltpu

LANE = 128
MAX_LANE = 1024


# --------------------------------------------------------------------------- #
# Kernels
# --------------------------------------------------------------------------- #
def _copy_kernel(x_ref, o_ref):
    # The base class defines no transformation of its inputs.
    o_ref[...] = x_ref[...]


def _add_kernel(x_ref, p_ref, o_ref):
    # Works for same-shape blocks AND for an in-kernel broadcast of a small
    # (1, C) / (1, 1) perturb block against the (rows, C) x block.  Promotion
    # to the output dtype happens on the VPU (free next to the DMA bound).
    out_dtype = o_ref.dtype
    o_ref[...] = x_ref[...].astype(out_dtype) + p_ref[...].astype(out_dtype)


# --------------------------------------------------------------------------- #
# Layout / sizing helpers
# --------------------------------------------------------------------------- #
def _sublane_multiple(dtype):
    # f32 -> 8, bf16 -> 16, int8/fp8 -> 32 (sub-32-bit dtypes pack along sublanes)
    bits = np.dtype(dtype).itemsize * 8
    return 8 * max(1, 32 // bits)


def _flat_2d_layout(size):
    """Lane-dense 2-D [R, C] view of a flat tensor with `size` elements."""
    if size <= 0:
        return 1, 1
    if size % LANE == 0:
        # Widen the lane axis up to 1024 while it still divides the flat size:
        # wide, multiple-of-128 output blocks give unmasked stores.
        c = LANE
        while c * 2 <= MAX_LANE and size % (c * 2) == 0:
            c *= 2
        return size // c, c
    # Not 128-divisible: pick the widest divisor <= MAX_LANE so masked stores
    # are amortised over as many lanes as possible (not shape[-1] blindly).
    for c in range(min(size, MAX_LANE), 0, -1):
        if size % c == 0:
            return size // c, c
    return size, 1


def _scoped_vmem_limit():
    # Generation-aware: v5e/v6e have 128 MiB physical VMEM (-> 64 MiB scoped),
    # v7x has 64 MiB (-> 32 MiB scoped).  Conservative 32 MiB fallback.
    try:
        cap = int(pltpu.get_tpu_info().vmem_capacity_bytes)
    except Exception:
        cap = 64 << 20
    return max(32 << 20, min(64 << 20, cap // 2))


def _suffix_shape(x_shape, p_shape):
    """Trailing suffix of x_shape matched by perturb (leading 1s stripped),
    or None if perturb does not broadcast purely along leading axes."""
    ps = list(p_shape)
    while ps and ps[0] == 1:
        ps.pop(0)
    if len(ps) > len(x_shape):
        return None
    if tuple(ps) != tuple(x_shape[len(x_shape) - len(ps):]):
        return None
    return tuple(ps)


def _pick_rows(R, C, bpe, sub, n_ops, max_block_bytes):
    vmem_limit = _scoped_vmem_limit()
    budget = max_block_bytes if max_block_bytes is not None else min(
        8 << 20, vmem_limit // (2 * n_ops))
    rows = max(sub, (budget // max(C * bpe, 1)) // sub * sub)
    total_bytes = R * C * bpe
    if total_bytes > (1 << 20):
        # Keep >= 4 grid steps: read/write DMA overlap + both v7x TCs stay busy.
        rows = min(rows, max(sub, (R // 4) // sub * sub))
    if rows >= R:
        rows = R        # full-extent block: always layout-legal
    return rows, vmem_limit


# --------------------------------------------------------------------------- #
# Forward
# --------------------------------------------------------------------------- #
def base_model_forward(x, perturb=None, *, force_copy=False, donate_x=False,
                       max_block_bytes=None):
    """Pallas 'forward' for BaseModel: identity, or x + perturb.

    perturb=None and force_copy=False short-circuits with zero HBM traffic —
    nothing on any TPU generation beats "no copy".
    """
    if perturb is None and not force_copy:
        return x

    orig_shape = tuple(x.shape)
    size = int(math.prod(orig_shape))
    out_dtype = x.dtype if perturb is None else jnp.result_type(x.dtype, perturb.dtype)

    if size == 0:
        # Empty tensors: nothing to move.
        if perturb is None:
            return x
        return x.astype(out_dtype) + jnp.broadcast_to(
            perturb.astype(out_dtype), orig_shape)

    # ---- choose mode & flat 2-D layout --------------------------------------
    mode = "copy"
    p_elems = None
    if perturb is not None:
        if tuple(perturb.shape) == orig_shape:
            mode = "add"
        else:
            suffix = _suffix_shape(orig_shape, tuple(perturb.shape))
            if suffix is not None:
                p_elems = int(math.prod(suffix))
            # In-kernel broadcast only while one resident (1, C) block is small.
            if p_elems is not None and p_elems * 4 * 32 <= (4 << 20):
                mode = "badd"
            else:
                # TODO(synk): rare general-broadcast perturb; materializing costs
                # one extra HBM pass of |x| — acceptable on this cold path only.
                perturb = jnp.broadcast_to(perturb, orig_shape)
                mode = "add"

    if mode == "badd" and p_elems > 1:
        C = p_elems                      # lane axis = broadcast suffix
        R = size // C
        p2 = perturb.reshape(1, C)
    else:
        R, C = _flat_2d_layout(size)
        if mode == "badd":               # scalar perturb broadcasts from (1, 1)
            p2 = perturb.reshape(1, 1)
        elif mode == "add":
            p2 = perturb.reshape(R, C)
        else:
            p2 = None
    x2 = x.reshape(R, C)

    # ---- tile sizing ---------------------------------------------------------
    dtypes = [x.dtype, out_dtype] + ([perturb.dtype] if perturb is not None else [])
    sub = max(_sublane_multiple(d) for d in dtypes)
    bpe = max(np.dtype(d).itemsize for d in (x.dtype, out_dtype))
    n_ops = 2 if mode == "copy" else 3
    rows, vmem_limit = _pick_rows(R, C, bpe, sub, n_ops, max_block_bytes)
    grid = (pl.cdiv(R, rows),)           # ragged last block -> masked writes

    blk = pl.BlockSpec((rows, C), lambda i: (i, 0))
    cost = pl.CostEstimate(
        flops=0 if mode == "copy" else size,
        transcendentals=0,
        bytes_accessed=n_ops * size * bpe,
    )
    cparams = pltpu.CompilerParams(
        dimension_semantics=("parallel",),   # row axis shards across v7x's 2 TCs
        vmem_limit_bytes=vmem_limit,         # v5e's 16 MiB default is too small
    )

    if mode == "copy":
        out = pl.pallas_call(
            _copy_kernel,
            out_shape=jax.ShapeDtypeStruct((R, C), out_dtype),
            grid=grid,
            in_specs=[blk],
            out_specs=blk,
            compiler_params=cparams,
            cost_estimate=cost,
        )(x2)
    else:
        if mode == "add":
            p_spec = pl.BlockSpec((rows, C), lambda i: (i, 0))
        else:  # "badd": single small resident block, broadcast in-kernel
            p_spec = pl.BlockSpec(p2.shape, lambda i: (0, 0))
        io_alias = {0: 0} if (donate_x and out_dtype == x.dtype) else {}
        out = pl.pallas_call(
            _add_kernel,
            out_shape=jax.ShapeDtypeStruct((R, C), out_dtype),
            grid=grid,
            in_specs=[blk, p_spec],
            out_specs=blk,
            compiler_params=cparams,
            cost_estimate=cost,
            input_output_aliases=io_alias,
        )(x2, p2)

    return out.reshape(orig_shape)


# --------------------------------------------------------------------------- #
# Self-test
# --------------------------------------------------------------------------- #
if __name__ == "__main__":
    key = jax.random.PRNGKey(0)
    kx, kp, kb, kx3, kp3 = jax.random.split(key, 5)

    # Small NCHW-style input a concrete subclass forward would receive.
    x = jax.random.normal(kx, (2, 4, 16, 16), dtype=jnp.float32)

    # 1) perturb=None: identity contract, zero-copy fast path.
    y = jax.block_until_ready(base_model_forward(x))
    assert y.shape == x.shape and y.dtype == x.dtype
    assert bool(jnp.allclose(y, x)), "identity forward mismatch"

    # 2) Forced copy exercises the Pallas copy kernel end-to-end.
    yc = jax.block_until_ready(base_model_forward(x, force_copy=True))
    assert yc.shape == x.shape and yc.dtype == x.dtype
    assert bool(jnp.allclose(yc, x)), "copy kernel mismatch"

    # 3) Same-shape perturb: tiled add kernel.
    perturb = jax.random.normal(kp, (2, 4, 16, 16), dtype=jnp.float32)
    expected = jax.block_until_ready(x + perturb)
    y2 = jax.block_until_ready(base_model_forward(x, perturb))
    assert y2.dtype == expected.dtype
    assert bool(jnp.allclose(y2, expected, atol=1e-6)), "perturb path mismatch"

    # 4) Broadcast perturb (trailing suffix): broadcast happens in-kernel,
    #    without materializing a full-size perturb in HBM.
    pb = jax.random.normal(kb, (16, 16), dtype=jnp.float32)
    expected_b = jax.block_until_ready(x + pb)
    yb = jax.block_until_ready(base_model_forward(x, pb))
    assert bool(jnp.allclose(yb, expected_b, atol=1e-6)), "broadcast perturb mismatch"

    # 5) Ragged multi-step grid (forced small blocks) + mixed-dtype promotion:
    #    exercises the masked last block and the multi-step pipelined path.
    x3 = jax.random.normal(kx3, (2, 3, 40, 128), dtype=jnp.float32)
    yc3 = jax.block_until_ready(
        base_model_forward(x3, force_copy=True, max_block_bytes=32 << 10))
    assert bool(jnp.allclose(yc3, x3)), "ragged copy mismatch"

    p3 = jax.random.normal(kp3, (2, 3, 40, 128), dtype=jnp.float32).astype(jnp.bfloat16)
    expected3 = jax.block_until_ready(x3 + p3)
    y3 = jax.block_until_ready(
        base_model_forward(x3, p3, max_block_bytes=32 << 10))
    assert y3.dtype == expected3.dtype
    assert bool(jnp.allclose(y3, expected3, atol=1e-6)), "ragged mixed-dtype add mismatch"

    print("KERNEL_OK")
</pallas_src>

<mosaic_0001>
module attributes {stable_mosaic.version = 11 : i64} {
  func.func @_copy_kernel(%arg0: i32, %arg1: memref<2x1024xf32, #tpu.memory_space<vmem>>, %arg2: memref<2x1024xf32, #tpu.memory_space<vmem>>) attributes {dimension_semantics = [#tpu.dimension_semantics<parallel>], iteration_bounds = array<i64: 1>, scalar_prefetch = 0 : i64, scratch_operands = 0 : i64, tpu.core_type = #tpu.core_type<tc>, window_params = [{transform_indices = @transform_0, window_bounds = array<i64: 2, 1024>}, {transform_indices = @transform_1, window_bounds = array<i64: 2, 1024>}]} {
    %c0 = arith.constant 0 : index
    %c0_0 = arith.constant 0 : index
    %0 = vector.load %arg1[%c0, %c0_0] : memref<2x1024xf32, #tpu.memory_space<vmem>>, vector<2x1024xf32>
    %c0_1 = arith.constant 0 : index
    %c0_2 = arith.constant 0 : index
    %1 = vector.load %arg2[%c0_1, %c0_2] : memref<2x1024xf32, #tpu.memory_space<vmem>>, vector<2x1024xf32>
    tpu.vector_store %arg2[%c0_1, %c0_2], %0 {strides = array<i32>} : memref<2x1024xf32, #tpu.memory_space<vmem>>, vector<2x1024xf32>,
    return
  }
  func.func @transform_0(%arg0: i32) -> (i32, i32) {
    %c0_i32 = arith.constant 0 : i32
    %c0_i32_0 = arith.constant 0 : i32
    return %arg0, %c0_i32 : i32, i32
  }
  func.func @transform_1(%arg0: i32) -> (i32, i32) {
    %c0_i32 = arith.constant 0 : i32
    %c0_i32_0 = arith.constant 0 : i32
    return %arg0, %c0_i32 : i32, i32
  }
}

</mosaic_0001>

<llo_original>
// kernel: tpu_custom_call.1
$region0: #{tpu_custom_call.1}
  #allocation0 [shape = 'u32[]', space=smem, size = 0x4, offset = 0x4, fixed_abs, tag = 'smem constant byte address 0x4 - core index']
  #allocation1 [shape = 'u32[144,128]{1,0:T(1,128)}', space=vmem, size = 0x12000, scoped, tag = 'internal scratch']
  %s0 = inlined_call_operand.hbm [shape: f32[2,1024], index: 0, kind: input, shape index: {}]
  %s1 = inlined_call_operand.hbm [shape: f32[2,1024], index: 1, kind: output, shape index: {}]
  %s2 = sld [smem:[#allocation0]]
  $region18: #{tpu_custom_call.1} parent=0
    _
  %s4 = ssub.s32 1, %s2
  %s5 = scalar_select 0, %s4, %s2
  $region1: #{tpu_custom_call.1} parent=0
    #allocation2 [shape = 'u8[8192]{0}', space=vmem, size = 0x2000, scoped, tag = 'input window, operand 0, single buffered']
    #allocation3 [shape = 's32[1]{0}', space=sflag, size = 0x4, scoped, tag = 'scoped memory for tpu_custom_call.1']
    #allocation4 [shape = 's32[1]{0}', space=sflag, size = 0x4, scoped, tag = 'scoped memory for tpu_custom_call.1']
    #allocation5 [shape = 'u8[8192]{0}', space=vmem, size = 0x2000, scoped, tag = 'output window, operand 0, single buffered']
    %6 = vsyncpa [#allocation3], 0
    %7 = vsyncpa [#allocation4], 0
    // Predicated region
    $region2: #{tpu_custom_call.1} parent=1 // pred_check
      _
    $region3: #{tpu_custom_call.1} parent=1 // pred_check_branch
      %9 = sbr.rel (0) target = $region5
    $region4: #{tpu_custom_call.1} parent=1 // pred_region
      %s11 = ssub.s32 256, 256
      %12 = vsyncadd [#allocation3], %s11
      %s14 = sshll.u32 [#allocation2], 4
      %s15 = int_to_ptr.vmem [resolvable:$true] %s14
      %17 = dma.hbm_to_vmem [thread:$0]  %s0, 256, %s15, [#allocation3]
    $region5: #{tpu_custom_call.1} parent=1 // pred_fallthru
      _
    // Predicated region
    $region6: #{tpu_custom_call.1} parent=1 // pred_check
      _
    $region7: #{tpu_custom_call.1} parent=1 // pred_check_branch
      %19 = sbr.rel (0) target = $region9
    $region8: #{tpu_custom_call.1} parent=1 // pred_region
      %20 = dma.done [#allocation3], 256
    $region9: #{tpu_custom_call.1} parent=1 // pred_fallthru
      _
    %v21 = vld [vmem:[#allocation2] sm:$0xff]
    %v22 = vld [vmem:[#allocation2 + $0x8] sm:$0xff]
    %23 = vst [vmem:[#allocation5] sm:$0xff] %v21
    %24 = vst [vmem:[#allocation5 + $0x8] sm:$0xff] %v22
    // Predicated region
    $region10: #{tpu_custom_call.1} parent=1 // pred_check
      _
    $region11: #{tpu_custom_call.1} parent=1 // pred_check_branch
      %26 = sbr.rel (0) target = $region13
    $region12: #{tpu_custom_call.1} parent=1 // pred_region
      %s28 = ssub.s32 256, 256
      %29 = vsyncadd [#allocation4], %s28
      %s31 = sshll.u32 [#allocation5], 4
      %s32 = int_to_ptr.vmem [resolvable:$true] %s31
      %34 = dma.vmem_to_hbm [thread:$0]  %s32, 256, %s1, [#allocation4]
    $region13: #{tpu_custom_call.1} parent=1 // pred_fallthru
      _
    // Predicated region
    $region14: #{tpu_custom_call.1} parent=1 // pred_check
      _
    $region15: #{tpu_custom_call.1} parent=1 // pred_check_branch
      %36 = sbr.rel (0) target = $region17
    $region16: #{tpu_custom_call.1} parent=1 // pred_region
      %37 = dma.done [#allocation4], 256
    $region17: #{tpu_custom_call.1} parent=1 // pred_fallthru
      _
    %38 = vsyncpa [#allocation3], 1
    %39 = vsyncpa [#allocation4], 1

</llo_original>
